<compile_context>
chip_gen: v6e
topology: v6e:2x2x1
jax: 0.10.0
libtpu: 0.0.40
codegen_flags: <defaults>
</compile_context>

<pallas_src>
import functools

import numpy as np
import jax
import jax.numpy as jnp
from jax import lax
from jax.experimental import pallas as pl
from jax.experimental.pallas import tpu as pltpu

N = 128           # number of graph nodes (lane-sized)
NEG_INF = -1e30   # "invalid candidate" score
DEG_EPS = 1e-20   # clamp for log(in_degree): zero-in-degree candidates are only picked
                  # once every positive-degree candidate is exhausted (the reference's
                  # torch.multinomial would have errored in that edge case).


def _np_sortable_key(x):
    """float32 -> monotone-sortable int32 key (numpy, compile-time constants only)."""
    b = np.asarray(x, np.float32).view(np.int32)
    k = np.where(b >= 0, b, b ^ np.int32(0x7FFFFFFF))
    return int(k)


# Any key strictly above this threshold is a real candidate (valid Gumbel/log-degree
# scores are bounded far above NEG_INF); masked / already-picked lanes sit below it.
_THRESH_KEY = _np_sortable_key(np.float32(NEG_INF) * np.float32(0.5))


def _sortable_keys(scores, n):
    """Encode f32 scores as monotone int32 keys with a low-bit positional tiebreak.

    One max reduce over the keys yields both the max score and its position (lowest
    index wins ties).  Clearing the low tie bits can in principle merge two distinct
    Gumbel scores into a tie; the probability is negligible and the tiebreak stays
    deterministic (lowest index)."""
    tie_bits = max(1, (n - 1).bit_length())      # 7 bits for N = 128
    idx = lax.broadcasted_iota(jnp.int32, scores.shape, scores.ndim - 1)
    bits = lax.bitcast_convert_type(scores.astype(jnp.float32), jnp.int32)
    keys = jnp.where(bits >= 0, bits, bits ^ jnp.int32(0x7FFFFFFF))
    keys = (keys & jnp.int32(-(1 << tie_bits))) | (jnp.int32((1 << tie_bits) - 1) - idx)
    return keys


def _gumbel_topk_rows(keys, sel, k):
    """k rounds of without-replacement top-k over the lane axis of `keys` (R, N) int32,
    all R rows in parallel.  Each round is ONE fused max+argmax cross-lane reduce;
    winners whose key passes the validity threshold are marked 1.0 in `sel` (R, N) f32
    and removed from the pool."""
    if k <= 0:
        return sel
    min_key = jnp.int32(jnp.iinfo(jnp.int32).min)

    def body(_, carry):
        ks, sl = carry
        rmax = jnp.max(ks, axis=-1, keepdims=True)       # fused max+argmax (lane in low bits)
        pick = ks == rmax                                # unique winner per row (keys distinct)
        sl = jnp.where(pick & (ks > _THRESH_KEY), 1.0, sl)
        ks = jnp.where(pick, min_key, ks)                # remove winner from the pool
        return ks, sl

    _, sel = lax.fori_loop(0, k, body, (keys, sel), unroll=True)
    return sel


def _sampler_kernel(adj_t_ref, ckey_ref, hkey_ref, center_ref, all_ref, *,
                    center_budget, nei_budget):
    n = adj_t_ref.shape[1]

    # ---- node_sampler: uniform sample of `center_budget` ids per class --------------
    # All classes batched over sublanes of one (8, N) key block -> one reduce per round.
    csel = _gumbel_topk_rows(ckey_ref[...], jnp.zeros((8, n), jnp.float32), center_budget)
    center = jnp.max(csel, axis=0, keepdims=True)        # (1, N) union over classes

    # ---- nei_sampler: in-degree-weighted sample of in-edge sources per hop ----------
    retained = center
    if any(b > 0 for b in nei_budget):
        # In-neighbour indicator of the centre set.  The reference never updates
        # nodes_selected_current_hop, so this matmul is loop-invariant across hops.
        adj_t = adj_t_ref[...]
        cur8 = jnp.broadcast_to(center, (8, n)).astype(adj_t.dtype)
        nb = jnp.dot(cur8, adj_t, preferred_element_type=jnp.float32)[0:1, :]  # (1, N)
        min_key = jnp.int32(jnp.iinfo(jnp.int32).min)
        for h, b in enumerate(nei_budget):
            if b == 0:
                continue
            cand = (nb > 0.0) & (retained == 0.0)
            hk = jnp.where(cand, hkey_ref[h:h + 1, :], min_key)
            retained = _gumbel_topk_rows(hk, retained, b)

    center_ref[...] = center
    all_ref[...] = retained


def degree_based_sampler_forward(adj, class_masks, center_node_budget, nei_budget,
                                 key, restart=0.0):
    """Returns (center_nodes_selected_mask, all_nodes_selected_mask), each (1, N) f32."""
    del restart                              # unused by the reference sampler as well
    n = adj.shape[0]
    c = class_masks.shape[0]
    assert c <= 8, "per-sublane batched centre top-k supports up to 8 classes"
    # TODO(synk): for >8 classes, tile the centre key block over multiple (8, N) slabs.
    nei_budget = tuple(int(b) for b in nei_budget)
    hrows = max(len(nei_budget), 1)

    # --- wrapper-side prologue: tiny XLA elementwise work hoisted out of the kernel --
    k_c, k_h = jax.random.split(key)
    u_c = jax.random.uniform(k_c, (8, n), jnp.float32, minval=1e-6, maxval=1.0 - 1e-6)
    u_h = jax.random.uniform(k_h, (hrows, n), jnp.float32, minval=1e-6, maxval=1.0 - 1e-6)
    g_c = -jnp.log(-jnp.log(u_c))            # Gumbel(0,1): random.sample == weight-1 top-k
    g_h = -jnp.log(-jnp.log(u_h))

    cls8 = jnp.zeros((8, n), jnp.float32).at[:c].set(class_masks.astype(jnp.float32))
    c_keys = _sortable_keys(jnp.where(cls8 > 0.0, g_c, NEG_INF), n)        # (8, N) int32

    in_deg = jnp.sum(adj.astype(jnp.float32), axis=0)        # graph.in_degrees()
    log_w = jnp.log(jnp.maximum(in_deg, DEG_EPS))
    h_keys = _sortable_keys(log_w[None, :] + g_h, n)                       # (H, N) int32

    # adj_t[d, s] = adj[s, d]: the hop matmul feeds the MXU its native [8,K]x[K,N]
    # layout (no in-kernel transpose).  0/1 values are exact in bf16.
    # TODO(synk): for very large N on v7x, store adj_t as fp8 (e4m3) and tile the hop
    #             matmul over a destination-node grid axis instead of full residency.
    adj_t = adj.astype(jnp.bfloat16).T

    kernel = functools.partial(_sampler_kernel,
                               center_budget=int(center_node_budget),
                               nei_budget=nei_budget)
    # Single invocation (no grid): loop-invariant inputs are placed whole in VMEM with
    # no double-buffering.  A batched (multi-graph) variant would add a leading
    # "parallel" grid axis to use both v7x TensorCores.
    center, all_nodes = pl.pallas_call(
        kernel,
        out_shape=(jax.ShapeDtypeStruct((1, n), jnp.float32),
                   jax.ShapeDtypeStruct((1, n), jnp.float32)),
        in_specs=[pl.BlockSpec(memory_space=pltpu.MemorySpace.VMEM),
                  pl.BlockSpec(memory_space=pltpu.MemorySpace.VMEM),
                  pl.BlockSpec(memory_space=pltpu.MemorySpace.VMEM)],
        out_specs=(pl.BlockSpec(memory_space=pltpu.MemorySpace.VMEM),
                   pl.BlockSpec(memory_space=pltpu.MemorySpace.VMEM)),
    )(adj_t, c_keys, h_keys)
    return center, all_nodes


# --------------------------------------------------------------------------------
if __name__ == "__main__":
    key = jax.random.PRNGKey(0)
    k_adj, k_samp = jax.random.split(key)

    # random sparse-ish directed graph, no self loops
    adj = (jax.random.uniform(k_adj, (N, N)) < 0.05).astype(jnp.float32)
    adj = adj * (1.0 - jnp.eye(N, dtype=jnp.float32))

    # ids_per_cls: 3 classes partitioning the nodes -> dense class masks (3, N)
    cls_sizes = [50, 40, 38]
    masks, start = [], 0
    for s in cls_sizes:
        masks.append(jnp.zeros((N,), jnp.float32).at[start:start + s].set(1.0))
        start += s
    class_masks = jnp.stack(masks)

    center_budget = 10
    nei_budget = [8, 4]
    center_mask, all_mask = degree_based_sampler_forward(
        adj, class_masks, center_budget, nei_budget, k_samp)
    jax.block_until_ready((center_mask, all_mask))

    # recover node-id lists (padded with -1), like the reference's Python lists
    center_ids = jnp.nonzero(center_mask[0] > 0, size=N, fill_value=-1)[0]
    all_ids = jnp.nonzero(all_mask[0] > 0, size=N, fill_value=-1)[0]
    jax.block_until_ready((center_ids, all_ids))

    # sanity checks (deterministic properties of the sampler)
    assert bool(jnp.all(all_mask >= center_mask))                        # centers ⊆ all
    assert int(jnp.sum(center_mask)) == len(cls_sizes) * center_budget   # full budgets
    n_all = int(jnp.sum(all_mask))
    assert (len(cls_sizes) * center_budget
            <= n_all
            <= len(cls_sizes) * center_budget + sum(nei_budget))
    assert bool(jnp.all(center_mask[0] <= jnp.max(class_masks, axis=0)))  # in classes
    print("KERNEL_OK")
</pallas_src>

<mosaic_0001>
module attributes {stable_mosaic.version = 11 : i64} {
  func.func @_sampler_kernel(%arg0: memref<128x128xbf16, #tpu.memory_space<vmem>>, %arg1: memref<8x128xi32, #tpu.memory_space<vmem>>, %arg2: memref<2x128xi32, #tpu.memory_space<vmem>>, %arg3: memref<1x128xf32, #tpu.memory_space<vmem>>, %arg4: memref<1x128xf32, #tpu.memory_space<vmem>>) attributes {dimension_semantics = [], scalar_prefetch = 0 : i64, scratch_operands = 0 : i64, tpu.core_type = #tpu.core_type<tc>} {
    %c0 = arith.constant 0 : index
    %c0_0 = arith.constant 0 : index
    %0 = vector.load %arg1[%c0, %c0_0] : memref<8x128xi32, #tpu.memory_space<vmem>>, vector<8x128xi32>
    %cst = arith.constant 0.000000e+00 : f32
    %1 = vector.broadcast %cst : f32 to vector<8x128xf32>
    %c-2147483648_i32 = arith.constant -2147483648 : i32
    %c0_i32 = arith.constant 0 : i32
    %cst_1 = arith.constant dense<-2147483648> : vector<8xi32>
    %2 = vector.multi_reduction <maxsi>, %0, %cst_1 [1] : vector<8x128xi32> to vector<8xi32>
    %3 = vector.shape_cast %2 : vector<8xi32> to vector<8x1xi32>
    %4 = vector.broadcast %3 : vector<8x1xi32> to vector<8x128xi32>
    %5 = arith.cmpi eq, %0, %4 : vector<8x128xi32>
    %c-1892283083_i32 = arith.constant -1892283083 : i32
    %6 = vector.broadcast %c-1892283083_i32 : i32 to vector<8x128xi32>
    %7 = arith.cmpi sgt, %0, %6 : vector<8x128xi32>
    %8 = arith.andi %5, %7 : vector<8x128xi1>
    %cst_2 = arith.constant 1.000000e+00 : f32
    %9 = vector.broadcast %cst_2 : f32 to vector<8x128xf32>
    %10 = arith.select %8, %9, %1 : vector<8x128xi1>, vector<8x128xf32>
    %11 = vector.broadcast %c-2147483648_i32 : i32 to vector<8x128xi32>
    %12 = arith.select %5, %11, %0 : vector<8x128xi1>, vector<8x128xi32>
    %c1_i32 = arith.constant 1 : i32
    %cst_3 = arith.constant dense<-2147483648> : vector<8xi32>
    %13 = vector.multi_reduction <maxsi>, %12, %cst_3 [1] : vector<8x128xi32> to vector<8xi32>
    %14 = vector.shape_cast %13 : vector<8xi32> to vector<8x1xi32>
    %15 = vector.broadcast %14 : vector<8x1xi32> to vector<8x128xi32>
    %16 = arith.cmpi eq, %12, %15 : vector<8x128xi32>
    %c-1892283083_i32_4 = arith.constant -1892283083 : i32
    %17 = vector.broadcast %c-1892283083_i32_4 : i32 to vector<8x128xi32>
    %18 = arith.cmpi sgt, %12, %17 : vector<8x128xi32>
    %19 = arith.andi %16, %18 : vector<8x128xi1>
    %cst_5 = arith.constant 1.000000e+00 : f32
    %20 = vector.broadcast %cst_5 : f32 to vector<8x128xf32>
    %21 = arith.select %19, %20, %10 : vector<8x128xi1>, vector<8x128xf32>
    %22 = vector.broadcast %c-2147483648_i32 : i32 to vector<8x128xi32>
    %23 = arith.select %16, %22, %12 : vector<8x128xi1>, vector<8x128xi32>
    %c2_i32 = arith.constant 2 : i32
    %cst_6 = arith.constant dense<-2147483648> : vector<8xi32>
    %24 = vector.multi_reduction <maxsi>, %23, %cst_6 [1] : vector<8x128xi32> to vector<8xi32>
    %25 = vector.shape_cast %24 : vector<8xi32> to vector<8x1xi32>
    %26 = vector.broadcast %25 : vector<8x1xi32> to vector<8x128xi32>
    %27 = arith.cmpi eq, %23, %26 : vector<8x128xi32>
    %c-1892283083_i32_7 = arith.constant -1892283083 : i32
    %28 = vector.broadcast %c-1892283083_i32_7 : i32 to vector<8x128xi32>
    %29 = arith.cmpi sgt, %23, %28 : vector<8x128xi32>
    %30 = arith.andi %27, %29 : vector<8x128xi1>
    %cst_8 = arith.constant 1.000000e+00 : f32
    %31 = vector.broadcast %cst_8 : f32 to vector<8x128xf32>
    %32 = arith.select %30, %31, %21 : vector<8x128xi1>, vector<8x128xf32>
    %33 = vector.broadcast %c-2147483648_i32 : i32 to vector<8x128xi32>
    %34 = arith.select %27, %33, %23 : vector<8x128xi1>, vector<8x128xi32>
    %c3_i32 = arith.constant 3 : i32
    %cst_9 = arith.constant dense<-2147483648> : vector<8xi32>
    %35 = vector.multi_reduction <maxsi>, %34, %cst_9 [1] : vector<8x128xi32> to vector<8xi32>
    %36 = vector.shape_cast %35 : vector<8xi32> to vector<8x1xi32>
    %37 = vector.broadcast %36 : vector<8x1xi32> to vector<8x128xi32>
    %38 = arith.cmpi eq, %34, %37 : vector<8x128xi32>
    %c-1892283083_i32_10 = arith.constant -1892283083 : i32
    %39 = vector.broadcast %c-1892283083_i32_10 : i32 to vector<8x128xi32>
    %40 = arith.cmpi sgt, %34, %39 : vector<8x128xi32>
    %41 = arith.andi %38, %40 : vector<8x128xi1>
    %cst_11 = arith.constant 1.000000e+00 : f32
    %42 = vector.broadcast %cst_11 : f32 to vector<8x128xf32>
    %43 = arith.select %41, %42, %32 : vector<8x128xi1>, vector<8x128xf32>
    %44 = vector.broadcast %c-2147483648_i32 : i32 to vector<8x128xi32>
    %45 = arith.select %38, %44, %34 : vector<8x128xi1>, vector<8x128xi32>
    %c4_i32 = arith.constant 4 : i32
    %cst_12 = arith.constant dense<-2147483648> : vector<8xi32>
    %46 = vector.multi_reduction <maxsi>, %45, %cst_12 [1] : vector<8x128xi32> to vector<8xi32>
    %47 = vector.shape_cast %46 : vector<8xi32> to vector<8x1xi32>
    %48 = vector.broadcast %47 : vector<8x1xi32> to vector<8x128xi32>
    %49 = arith.cmpi eq, %45, %48 : vector<8x128xi32>
    %c-1892283083_i32_13 = arith.constant -1892283083 : i32
    %50 = vector.broadcast %c-1892283083_i32_13 : i32 to vector<8x128xi32>
    %51 = arith.cmpi sgt, %45, %50 : vector<8x128xi32>
    %52 = arith.andi %49, %51 : vector<8x128xi1>
    %cst_14 = arith.constant 1.000000e+00 : f32
    %53 = vector.broadcast %cst_14 : f32 to vector<8x128xf32>
    %54 = arith.select %52, %53, %43 : vector<8x128xi1>, vector<8x128xf32>
    %55 = vector.broadcast %c-2147483648_i32 : i32 to vector<8x128xi32>
    %56 = arith.select %49, %55, %45 : vector<8x128xi1>, vector<8x128xi32>
    %c5_i32 = arith.constant 5 : i32
    %cst_15 = arith.constant dense<-2147483648> : vector<8xi32>
    %57 = vector.multi_reduction <maxsi>, %56, %cst_15 [1] : vector<8x128xi32> to vector<8xi32>
    %58 = vector.shape_cast %57 : vector<8xi32> to vector<8x1xi32>
    %59 = vector.broadcast %58 : vector<8x1xi32> to vector<8x128xi32>
    %60 = arith.cmpi eq, %56, %59 : vector<8x128xi32>
    %c-1892283083_i32_16 = arith.constant -1892283083 : i32
    %61 = vector.broadcast %c-1892283083_i32_16 : i32 to vector<8x128xi32>
    %62 = arith.cmpi sgt, %56, %61 : vector<8x128xi32>
    %63 = arith.andi %60, %62 : vector<8x128xi1>
    %cst_17 = arith.constant 1.000000e+00 : f32
    %64 = vector.broadcast %cst_17 : f32 to vector<8x128xf32>
    %65 = arith.select %63, %64, %54 : vector<8x128xi1>, vector<8x128xf32>
    %66 = vector.broadcast %c-2147483648_i32 : i32 to vector<8x128xi32>
    %67 = arith.select %60, %66, %56 : vector<8x128xi1>, vector<8x128xi32>
    %c6_i32 = arith.constant 6 : i32
    %cst_18 = arith.constant dense<-2147483648> : vector<8xi32>
    %68 = vector.multi_reduction <maxsi>, %67, %cst_18 [1] : vector<8x128xi32> to vector<8xi32>
    %69 = vector.shape_cast %68 : vector<8xi32> to vector<8x1xi32>
    %70 = vector.broadcast %69 : vector<8x1xi32> to vector<8x128xi32>
    %71 = arith.cmpi eq, %67, %70 : vector<8x128xi32>
    %c-1892283083_i32_19 = arith.constant -1892283083 : i32
    %72 = vector.broadcast %c-1892283083_i32_19 : i32 to vector<8x128xi32>
    %73 = arith.cmpi sgt, %67, %72 : vector<8x128xi32>
    %74 = arith.andi %71, %73 : vector<8x128xi1>
    %cst_20 = arith.constant 1.000000e+00 : f32
    %75 = vector.broadcast %cst_20 : f32 to vector<8x128xf32>
    %76 = arith.select %74, %75, %65 : vector<8x128xi1>, vector<8x128xf32>
    %77 = vector.broadcast %c-2147483648_i32 : i32 to vector<8x128xi32>
    %78 = arith.select %71, %77, %67 : vector<8x128xi1>, vector<8x128xi32>
    %c7_i32 = arith.constant 7 : i32
    %cst_21 = arith.constant dense<-2147483648> : vector<8xi32>
    %79 = vector.multi_reduction <maxsi>, %78, %cst_21 [1] : vector<8x128xi32> to vector<8xi32>
    %80 = vector.shape_cast %79 : vector<8xi32> to vector<8x1xi32>
    %81 = vector.broadcast %80 : vector<8x1xi32> to vector<8x128xi32>
    %82 = arith.cmpi eq, %78, %81 : vector<8x128xi32>
    %c-1892283083_i32_22 = arith.constant -1892283083 : i32
    %83 = vector.broadcast %c-1892283083_i32_22 : i32 to vector<8x128xi32>
    %84 = arith.cmpi sgt, %78, %83 : vector<8x128xi32>
    %85 = arith.andi %82, %84 : vector<8x128xi1>
    %cst_23 = arith.constant 1.000000e+00 : f32
    %86 = vector.broadcast %cst_23 : f32 to vector<8x128xf32>
    %87 = arith.select %85, %86, %76 : vector<8x128xi1>, vector<8x128xf32>
    %88 = vector.broadcast %c-2147483648_i32 : i32 to vector<8x128xi32>
    %89 = arith.select %82, %88, %78 : vector<8x128xi1>, vector<8x128xi32>
    %c8_i32 = arith.constant 8 : i32
    %cst_24 = arith.constant dense<-2147483648> : vector<8xi32>
    %90 = vector.multi_reduction <maxsi>, %89, %cst_24 [1] : vector<8x128xi32> to vector<8xi32>
    %91 = vector.shape_cast %90 : vector<8xi32> to vector<8x1xi32>
    %92 = vector.broadcast %91 : vector<8x1xi32> to vector<8x128xi32>
    %93 = arith.cmpi eq, %89, %92 : vector<8x128xi32>
    %c-1892283083_i32_25 = arith.constant -1892283083 : i32
    %94 = vector.broadcast %c-1892283083_i32_25 : i32 to vector<8x128xi32>
    %95 = arith.cmpi sgt, %89, %94 : vector<8x128xi32>
    %96 = arith.andi %93, %95 : vector<8x128xi1>
    %cst_26 = arith.constant 1.000000e+00 : f32
    %97 = vector.broadcast %cst_26 : f32 to vector<8x128xf32>
    %98 = arith.select %96, %97, %87 : vector<8x128xi1>, vector<8x128xf32>
    %99 = vector.broadcast %c-2147483648_i32 : i32 to vector<8x128xi32>
    %100 = arith.select %93, %99, %89 : vector<8x128xi1>, vector<8x128xi32>
    %c9_i32 = arith.constant 9 : i32
    %cst_27 = arith.constant dense<-2147483648> : vector<8xi32>
    %101 = vector.multi_reduction <maxsi>, %100, %cst_27 [1] : vector<8x128xi32> to vector<8xi32>
    %102 = vector.shape_cast %101 : vector<8xi32> to vector<8x1xi32>
    %103 = vector.broadcast %102 : vector<8x1xi32> to vector<8x128xi32>
    %104 = arith.cmpi eq, %100, %103 : vector<8x128xi32>
    %c-1892283083_i32_28 = arith.constant -1892283083 : i32
    %105 = vector.broadcast %c-1892283083_i32_28 : i32 to vector<8x128xi32>
    %106 = arith.cmpi sgt, %100, %105 : vector<8x128xi32>
    %107 = arith.andi %104, %106 : vector<8x128xi1>
    %cst_29 = arith.constant 1.000000e+00 : f32
    %108 = vector.broadcast %cst_29 : f32 to vector<8x128xf32>
    %109 = arith.select %107, %108, %98 : vector<8x128xi1>, vector<8x128xf32>
    %110 = vector.broadcast %c-2147483648_i32 : i32 to vector<8x128xi32>
    %111 = arith.select %104, %110, %100 : vector<8x128xi1>, vector<8x128xi32>
    %cst_30 = arith.constant dense<0xFF800000> : vector<128xf32>
    %112 = vector.multi_reduction <maximumf>, %109, %cst_30 [0] : vector<8x128xf32> to vector<128xf32>
    %113 = vector.shape_cast %112 : vector<128xf32> to vector<1x128xf32>
    %c0_31 = arith.constant 0 : index
    %c0_32 = arith.constant 0 : index
    %114 = vector.load %arg0[%c0_31, %c0_32] : memref<128x128xbf16, #tpu.memory_space<vmem>>, vector<128x128xbf16>
    %115 = vector.shape_cast %113 : vector<1x128xf32> to vector<1x128xf32>
    %116 = vector.broadcast %115 : vector<1x128xf32> to vector<8x128xf32>
    %117 = arith.truncf %116 : vector<8x128xf32> to vector<8x128xbf16>
    %cst_33 = arith.constant dense<0.000000e+00> : vector<8x128xf32>
    %118 = tpu.matmul %117, %114, %cst_33 {dimension_numbers = #tpu.dot_dimension_numbers<[1], [0], [0], [1], [0, 0, 1, 1], [], []>} : vector<8x128xbf16>, vector<128x128xbf16>, vector<8x128xf32> -> vector<8x128xf32>
    %119 = vector.extract_strided_slice %118 {offsets = [0, 0], sizes = [1, 128], strides = [1, 1]} : vector<8x128xf32> to vector<1x128xf32>
    %cst_34 = arith.constant 0.000000e+00 : f32
    %120 = vector.broadcast %cst_34 : f32 to vector<1x128xf32>
    %121 = arith.cmpf ogt, %119, %120 : vector<1x128xf32>
    %cst_35 = arith.constant 0.000000e+00 : f32
    %122 = vector.broadcast %cst_35 : f32 to vector<1x128xf32>
    %123 = arith.cmpf oeq, %113, %122 : vector<1x128xf32>
    %124 = arith.andi %121, %123 : vector<1x128xi1>
    %c0_36 = arith.constant 0 : index
    %c0_37 = arith.constant 0 : index
    %125 = vector.load %arg2[%c0_36, %c0_37] : memref<2x128xi32, #tpu.memory_space<vmem>>, vector<1x128xi32>
    %c-2147483648_i32_38 = arith.constant -2147483648 : i32
    %126 = vector.broadcast %c-2147483648_i32_38 : i32 to vector<1x128xi32>
    %127 = arith.select %124, %125, %126 : vector<1x128xi1>, vector<1x128xi32>
    %c-2147483648_i32_39 = arith.constant -2147483648 : i32
    %c0_i32_40 = arith.constant 0 : i32
    %cst_41 = arith.constant dense<-2147483648> : vector<1xi32>
    %128 = vector.multi_reduction <maxsi>, %127, %cst_41 [1] : vector<1x128xi32> to vector<1xi32>
    %129 = vector.shape_cast %128 : vector<1xi32> to vector<1x1xi32>
    %130 = vector.broadcast %129 : vector<1x1xi32> to vector<1x128xi32>
    %131 = arith.cmpi eq, %127, %130 : vector<1x128xi32>
    %c-1892283083_i32_42 = arith.constant -1892283083 : i32
    %132 = vector.broadcast %c-1892283083_i32_42 : i32 to vector<1x128xi32>
    %133 = arith.cmpi sgt, %127, %132 : vector<1x128xi32>
    %134 = arith.andi %131, %133 : vector<1x128xi1>
    %cst_43 = arith.constant 1.000000e+00 : f32
    %135 = vector.broadcast %cst_43 : f32 to vector<1x128xf32>
    %136 = arith.select %134, %135, %113 : vector<1x128xi1>, vector<1x128xf32>
    %137 = vector.broadcast %c-2147483648_i32_39 : i32 to vector<1x128xi32>
    %138 = arith.select %131, %137, %127 : vector<1x128xi1>, vector<1x128xi32>
    %c1_i32_44 = arith.constant 1 : i32
    %cst_45 = arith.constant dense<-2147483648> : vector<1xi32>
    %139 = vector.multi_reduction <maxsi>, %138, %cst_45 [1] : vector<1x128xi32> to vector<1xi32>
    %140 = vector.shape_cast %139 : vector<1xi32> to vector<1x1xi32>
    %141 = vector.broadcast %140 : vector<1x1xi32> to vector<1x128xi32>
    %142 = arith.cmpi eq, %138, %141 : vector<1x128xi32>
    %c-1892283083_i32_46 = arith.constant -1892283083 : i32
    %143 = vector.broadcast %c-1892283083_i32_46 : i32 to vector<1x128xi32>
    %144 = arith.cmpi sgt, %138, %143 : vector<1x128xi32>
    %145 = arith.andi %142, %144 : vector<1x128xi1>
    %cst_47 = arith.constant 1.000000e+00 : f32
    %146 = vector.broadcast %cst_47 : f32 to vector<1x128xf32>
    %147 = arith.select %145, %146, %136 : vector<1x128xi1>, vector<1x128xf32>
    %148 = vector.broadcast %c-2147483648_i32_39 : i32 to vector<1x128xi32>
    %149 = arith.select %142, %148, %138 : vector<1x128xi1>, vector<1x128xi32>
    %c2_i32_48 = arith.constant 2 : i32
    %cst_49 = arith.constant dense<-2147483648> : vector<1xi32>
    %150 = vector.multi_reduction <maxsi>, %149, %cst_49 [1] : vector<1x128xi32> to vector<1xi32>
    %151 = vector.shape_cast %150 : vector<1xi32> to vector<1x1xi32>
    %152 = vector.broadcast %151 : vector<1x1xi32> to vector<1x128xi32>
    %153 = arith.cmpi eq, %149, %152 : vector<1x128xi32>
    %c-1892283083_i32_50 = arith.constant -1892283083 : i32
    %154 = vector.broadcast %c-1892283083_i32_50 : i32 to vector<1x128xi32>
    %155 = arith.cmpi sgt, %149, %154 : vector<1x128xi32>
    %156 = arith.andi %153, %155 : vector<1x128xi1>
    %cst_51 = arith.constant 1.000000e+00 : f32
    %157 = vector.broadcast %cst_51 : f32 to vector<1x128xf32>
    %158 = arith.select %156, %157, %147 : vector<1x128xi1>, vector<1x128xf32>
    %159 = vector.broadcast %c-2147483648_i32_39 : i32 to vector<1x128xi32>
    %160 = arith.select %153, %159, %149 : vector<1x128xi1>, vector<1x128xi32>
    %c3_i32_52 = arith.constant 3 : i32
    %cst_53 = arith.constant dense<-2147483648> : vector<1xi32>
    %161 = vector.multi_reduction <maxsi>, %160, %cst_53 [1] : vector<1x128xi32> to vector<1xi32>
    %162 = vector.shape_cast %161 : vector<1xi32> to vector<1x1xi32>
    %163 = vector.broadcast %162 : vector<1x1xi32> to vector<1x128xi32>
    %164 = arith.cmpi eq, %160, %163 : vector<1x128xi32>
    %c-1892283083_i32_54 = arith.constant -1892283083 : i32
    %165 = vector.broadcast %c-1892283083_i32_54 : i32 to vector<1x128xi32>
    %166 = arith.cmpi sgt, %160, %165 : vector<1x128xi32>
    %167 = arith.andi %164, %166 : vector<1x128xi1>
    %cst_55 = arith.constant 1.000000e+00 : f32
    %168 = vector.broadcast %cst_55 : f32 to vector<1x128xf32>
    %169 = arith.select %167, %168, %158 : vector<1x128xi1>, vector<1x128xf32>
    %170 = vector.broadcast %c-2147483648_i32_39 : i32 to vector<1x128xi32>
    %171 = arith.select %164, %170, %160 : vector<1x128xi1>, vector<1x128xi32>
    %c4_i32_56 = arith.constant 4 : i32
    %cst_57 = arith.constant dense<-2147483648> : vector<1xi32>
    %172 = vector.multi_reduction <maxsi>, %171, %cst_57 [1] : vector<1x128xi32> to vector<1xi32>
    %173 = vector.shape_cast %172 : vector<1xi32> to vector<1x1xi32>
    %174 = vector.broadcast %173 : vector<1x1xi32> to vector<1x128xi32>
    %175 = arith.cmpi eq, %171, %174 : vector<1x128xi32>
    %c-1892283083_i32_58 = arith.constant -1892283083 : i32
    %176 = vector.broadcast %c-1892283083_i32_58 : i32 to vector<1x128xi32>
    %177 = arith.cmpi sgt, %171, %176 : vector<1x128xi32>
    %178 = arith.andi %175, %177 : vector<1x128xi1>
    %cst_59 = arith.constant 1.000000e+00 : f32
    %179 = vector.broadcast %cst_59 : f32 to vector<1x128xf32>
    %180 = arith.select %178, %179, %169 : vector<1x128xi1>, vector<1x128xf32>
    %181 = vector.broadcast %c-2147483648_i32_39 : i32 to vector<1x128xi32>
    %182 = arith.select %175, %181, %171 : vector<1x128xi1>, vector<1x128xi32>
    %c5_i32_60 = arith.constant 5 : i32
    %cst_61 = arith.constant dense<-2147483648> : vector<1xi32>
    %183 = vector.multi_reduction <maxsi>, %182, %cst_61 [1] : vector<1x128xi32> to vector<1xi32>
    %184 = vector.shape_cast %183 : vector<1xi32> to vector<1x1xi32>
    %185 = vector.broadcast %184 : vector<1x1xi32> to vector<1x128xi32>
    %186 = arith.cmpi eq, %182, %185 : vector<1x128xi32>
    %c-1892283083_i32_62 = arith.constant -1892283083 : i32
    %187 = vector.broadcast %c-1892283083_i32_62 : i32 to vector<1x128xi32>
    %188 = arith.cmpi sgt, %182, %187 : vector<1x128xi32>
    %189 = arith.andi %186, %188 : vector<1x128xi1>
    %cst_63 = arith.constant 1.000000e+00 : f32
    %190 = vector.broadcast %cst_63 : f32 to vector<1x128xf32>
    %191 = arith.select %189, %190, %180 : vector<1x128xi1>, vector<1x128xf32>
    %192 = vector.broadcast %c-2147483648_i32_39 : i32 to vector<1x128xi32>
    %193 = arith.select %186, %192, %182 : vector<1x128xi1>, vector<1x128xi32>
    %c6_i32_64 = arith.constant 6 : i32
    %cst_65 = arith.constant dense<-2147483648> : vector<1xi32>
    %194 = vector.multi_reduction <maxsi>, %193, %cst_65 [1] : vector<1x128xi32> to vector<1xi32>
    %195 = vector.shape_cast %194 : vector<1xi32> to vector<1x1xi32>
    %196 = vector.broadcast %195 : vector<1x1xi32> to vector<1x128xi32>
    %197 = arith.cmpi eq, %193, %196 : vector<1x128xi32>
    %c-1892283083_i32_66 = arith.constant -1892283083 : i32
    %198 = vector.broadcast %c-1892283083_i32_66 : i32 to vector<1x128xi32>
    %199 = arith.cmpi sgt, %193, %198 : vector<1x128xi32>
    %200 = arith.andi %197, %199 : vector<1x128xi1>
    %cst_67 = arith.constant 1.000000e+00 : f32
    %201 = vector.broadcast %cst_67 : f32 to vector<1x128xf32>
    %202 = arith.select %200, %201, %191 : vector<1x128xi1>, vector<1x128xf32>
    %203 = vector.broadcast %c-2147483648_i32_39 : i32 to vector<1x128xi32>
    %204 = arith.select %197, %203, %193 : vector<1x128xi1>, vector<1x128xi32>
    %c7_i32_68 = arith.constant 7 : i32
    %cst_69 = arith.constant dense<-2147483648> : vector<1xi32>
    %205 = vector.multi_reduction <maxsi>, %204, %cst_69 [1] : vector<1x128xi32> to vector<1xi32>
    %206 = vector.shape_cast %205 : vector<1xi32> to vector<1x1xi32>
    %207 = vector.broadcast %206 : vector<1x1xi32> to vector<1x128xi32>
    %208 = arith.cmpi eq, %204, %207 : vector<1x128xi32>
    %c-1892283083_i32_70 = arith.constant -1892283083 : i32
    %209 = vector.broadcast %c-1892283083_i32_70 : i32 to vector<1x128xi32>
    %210 = arith.cmpi sgt, %204, %209 : vector<1x128xi32>
    %211 = arith.andi %208, %210 : vector<1x128xi1>
    %cst_71 = arith.constant 1.000000e+00 : f32
    %212 = vector.broadcast %cst_71 : f32 to vector<1x128xf32>
    %213 = arith.select %211, %212, %202 : vector<1x128xi1>, vector<1x128xf32>
    %214 = vector.broadcast %c-2147483648_i32_39 : i32 to vector<1x128xi32>
    %215 = arith.select %208, %214, %204 : vector<1x128xi1>, vector<1x128xi32>
    %cst_72 = arith.constant 0.000000e+00 : f32
    %216 = vector.broadcast %cst_72 : f32 to vector<1x128xf32>
    %217 = arith.cmpf ogt, %119, %216 : vector<1x128xf32>
    %cst_73 = arith.constant 0.000000e+00 : f32
    %218 = vector.broadcast %cst_73 : f32 to vector<1x128xf32>
    %219 = arith.cmpf oeq, %213, %218 : vector<1x128xf32>
    %220 = arith.andi %217, %219 : vector<1x128xi1>
    %c1 = arith.constant 1 : index
    %c0_74 = arith.constant 0 : index
    %221 = vector.load %arg2[%c1, %c0_74] : memref<2x128xi32, #tpu.memory_space<vmem>>, vector<1x128xi32>
    %c-2147483648_i32_75 = arith.constant -2147483648 : i32
    %222 = vector.broadcast %c-2147483648_i32_75 : i32 to vector<1x128xi32>
    %223 = arith.select %220, %221, %222 : vector<1x128xi1>, vector<1x128xi32>
    %c-2147483648_i32_76 = arith.constant -2147483648 : i32
    %c0_i32_77 = arith.constant 0 : i32
    %cst_78 = arith.constant dense<-2147483648> : vector<1xi32>
    %224 = vector.multi_reduction <maxsi>, %223, %cst_78 [1] : vector<1x128xi32> to vector<1xi32>
    %225 = vector.shape_cast %224 : vector<1xi32> to vector<1x1xi32>
    %226 = vector.broadcast %225 : vector<1x1xi32> to vector<1x128xi32>
    %227 = arith.cmpi eq, %223, %226 : vector<1x128xi32>
    %c-1892283083_i32_79 = arith.constant -1892283083 : i32
    %228 = vector.broadcast %c-1892283083_i32_79 : i32 to vector<1x128xi32>
    %229 = arith.cmpi sgt, %223, %228 : vector<1x128xi32>
    %230 = arith.andi %227, %229 : vector<1x128xi1>
    %cst_80 = arith.constant 1.000000e+00 : f32
    %231 = vector.broadcast %cst_80 : f32 to vector<1x128xf32>
    %232 = arith.select %230, %231, %213 : vector<1x128xi1>, vector<1x128xf32>
    %233 = vector.broadcast %c-2147483648_i32_76 : i32 to vector<1x128xi32>
    %234 = arith.select %227, %233, %223 : vector<1x128xi1>, vector<1x128xi32>
    %c1_i32_81 = arith.constant 1 : i32
    %cst_82 = arith.constant dense<-2147483648> : vector<1xi32>
    %235 = vector.multi_reduction <maxsi>, %234, %cst_82 [1] : vector<1x128xi32> to vector<1xi32>
    %236 = vector.shape_cast %235 : vector<1xi32> to vector<1x1xi32>
    %237 = vector.broadcast %236 : vector<1x1xi32> to vector<1x128xi32>
    %238 = arith.cmpi eq, %234, %237 : vector<1x128xi32>
    %c-1892283083_i32_83 = arith.constant -1892283083 : i32
    %239 = vector.broadcast %c-1892283083_i32_83 : i32 to vector<1x128xi32>
    %240 = arith.cmpi sgt, %234, %239 : vector<1x128xi32>
    %241 = arith.andi %238, %240 : vector<1x128xi1>
    %cst_84 = arith.constant 1.000000e+00 : f32
    %242 = vector.broadcast %cst_84 : f32 to vector<1x128xf32>
    %243 = arith.select %241, %242, %232 : vector<1x128xi1>, vector<1x128xf32>
    %244 = vector.broadcast %c-2147483648_i32_76 : i32 to vector<1x128xi32>
    %245 = arith.select %238, %244, %234 : vector<1x128xi1>, vector<1x128xi32>
    %c2_i32_85 = arith.constant 2 : i32
    %cst_86 = arith.constant dense<-2147483648> : vector<1xi32>
    %246 = vector.multi_reduction <maxsi>, %245, %cst_86 [1] : vector<1x128xi32> to vector<1xi32>
    %247 = vector.shape_cast %246 : vector<1xi32> to vector<1x1xi32>
    %248 = vector.broadcast %247 : vector<1x1xi32> to vector<1x128xi32>
    %249 = arith.cmpi eq, %245, %248 : vector<1x128xi32>
    %c-1892283083_i32_87 = arith.constant -1892283083 : i32
    %250 = vector.broadcast %c-1892283083_i32_87 : i32 to vector<1x128xi32>
    %251 = arith.cmpi sgt, %245, %250 : vector<1x128xi32>
    %252 = arith.andi %249, %251 : vector<1x128xi1>
    %cst_88 = arith.constant 1.000000e+00 : f32
    %253 = vector.broadcast %cst_88 : f32 to vector<1x128xf32>
    %254 = arith.select %252, %253, %243 : vector<1x128xi1>, vector<1x128xf32>
    %255 = vector.broadcast %c-2147483648_i32_76 : i32 to vector<1x128xi32>
    %256 = arith.select %249, %255, %245 : vector<1x128xi1>, vector<1x128xi32>
    %c3_i32_89 = arith.constant 3 : i32
    %cst_90 = arith.constant dense<-2147483648> : vector<1xi32>
    %257 = vector.multi_reduction <maxsi>, %256, %cst_90 [1] : vector<1x128xi32> to vector<1xi32>
    %258 = vector.shape_cast %257 : vector<1xi32> to vector<1x1xi32>
    %259 = vector.broadcast %258 : vector<1x1xi32> to vector<1x128xi32>
    %260 = arith.cmpi eq, %256, %259 : vector<1x128xi32>
    %c-1892283083_i32_91 = arith.constant -1892283083 : i32
    %261 = vector.broadcast %c-1892283083_i32_91 : i32 to vector<1x128xi32>
    %262 = arith.cmpi sgt, %256, %261 : vector<1x128xi32>
    %263 = arith.andi %260, %262 : vector<1x128xi1>
    %cst_92 = arith.constant 1.000000e+00 : f32
    %264 = vector.broadcast %cst_92 : f32 to vector<1x128xf32>
    %265 = arith.select %263, %264, %254 : vector<1x128xi1>, vector<1x128xf32>
    %266 = vector.broadcast %c-2147483648_i32_76 : i32 to vector<1x128xi32>
    %267 = arith.select %260, %266, %256 : vector<1x128xi1>, vector<1x128xi32>
    %c0_93 = arith.constant 0 : index
    %c0_94 = arith.constant 0 : index
    %268 = vector.load %arg3[%c0_93, %c0_94] : memref<1x128xf32, #tpu.memory_space<vmem>>, vector<1x128xf32>
    tpu.vector_store %arg3[%c0_93, %c0_94], %113 {strides = array<i32>} : memref<1x128xf32, #tpu.memory_space<vmem>>, vector<1x128xf32>,
    %c0_95 = arith.constant 0 : index
    %c0_96 = arith.constant 0 : index
    %269 = vector.load %arg4[%c0_95, %c0_96] : memref<1x128xf32, #tpu.memory_space<vmem>>, vector<1x128xf32>
    tpu.vector_store %arg4[%c0_95, %c0_96], %265 {strides = array<i32>} : memref<1x128xf32, #tpu.memory_space<vmem>>, vector<1x128xf32>,
    return
  }
}

</mosaic_0001>

<llo_original>
// kernel: tpu_custom_call.1
$region0: #{tpu_custom_call.1}
  #allocation0 [shape = 'u32[]', space=smem, size = 0x4, offset = 0x4, fixed_abs, tag = 'smem constant byte address 0x4 - core index']
  #allocation1 [shape = 'u32[144,128]{1,0:T(1,128)}', space=vmem, size = 0x12000, scoped, tag = 'internal scratch']
  %s0 = inlined_call_operand.hbm [shape: bf16[128,128], index: 0, kind: input, shape index: {}]
  %s1 = inlined_call_operand.hbm [shape: s32[8,128], index: 1, kind: input, shape index: {}]
  %s2 = inlined_call_operand.vmem [shape: s32[2,128], index: 2, kind: input, shape index: {}]
  %s3 = inlined_call_operand.hbm [shape: f32[1,128], index: 3, kind: output, shape index: {0}]
  %s4 = inlined_call_operand.hbm [shape: f32[1,128], index: 4, kind: output, shape index: {1}]
  %5 = xla_tuple %s3, %s4
  %s6 = sld [smem:[#allocation0]]
  $region38: #{tpu_custom_call.1} parent=0
    _
  %s8 = ssub.s32 1, %s6
  %s9 = scalar_select 0, %s8, %s6
  $region1: #{tpu_custom_call.1} parent=0
    #allocation2 [shape = 'u8[32768]{0}', space=vmem, size = 0x8000, scoped, tag = 'input window, operand 0, single buffered']
    #allocation3 [shape = 's32[1]{0}', space=sflag, size = 0x4, scoped, tag = 'scoped memory for tpu_custom_call.1']
    #allocation4 [shape = 's32[1]{0}', space=sflag, size = 0x4, scoped, tag = 'scoped memory for tpu_custom_call.1']
    #allocation5 [shape = 'u8[4096]{0}', space=vmem, size = 0x1000, scoped, tag = 'input window, operand 1, single buffered']
    #allocation6 [shape = 's32[1]{0}', space=sflag, size = 0x4, scoped, tag = 'scoped memory for tpu_custom_call.1']
    #allocation7 [shape = 'u8[512]{0}', space=vmem, size = 0x400, scoped, tag = 'output window, operand 0, single buffered']
    #allocation8 [shape = 'u8[512]{0}', space=vmem, size = 0x400, scoped, tag = 'output window, operand 1, single buffered']
    #allocation9 [shape = 's32[1]{0}', space=sflag, size = 0x4, scoped, tag = 'scoped memory for tpu_custom_call.1']
    %10 = vsyncpa [#allocation3], 0
    %11 = vsyncpa [#allocation6], 0
    %12 = vsyncpa [#allocation4], 0
    %13 = vsyncpa [#allocation9], 0
    // Predicated region
    $region2: #{tpu_custom_call.1} parent=1 // pred_check
      _
    $region3: #{tpu_custom_call.1} parent=1 // pred_check_branch
      %15 = sbr.rel (0) target = $region5
    $region4: #{tpu_custom_call.1} parent=1 // pred_region
      %s17 = ssub.s32 1024, 1024
      %18 = vsyncadd [#allocation3], %s17
      %s19 = sshll.u32 [#allocation2], 4
      %s20 = int_to_ptr.vmem [resolvable:$true] %s19
      %25 = dma.hbm_to_vmem [thread:$0]  %s0, 1024, %s20, [#allocation3], 64, 64, 4
    $region5: #{tpu_custom_call.1} parent=1 // pred_fallthru
      _
    // Predicated region
    $region6: #{tpu_custom_call.1} parent=1 // pred_check
      _
    $region7: #{tpu_custom_call.1} parent=1 // pred_check_branch
      %27 = sbr.rel (0) target = $region9
    $region8: #{tpu_custom_call.1} parent=1 // pred_region
      %s29 = ssub.s32 128, 128
      %30 = vsyncadd [#allocation6], %s29
      %s32 = sshll.u32 [#allocation5], 4
      %s33 = int_to_ptr.vmem [resolvable:$true] %s32
      %35 = dma.hbm_to_vmem [thread:$0]  %s1, 128, %s33, [#allocation6]
    $region9: #{tpu_custom_call.1} parent=1 // pred_fallthru
      _
    // Predicated region
    $region10: #{tpu_custom_call.1} parent=1 // pred_check
      _
    $region11: #{tpu_custom_call.1} parent=1 // pred_check_branch
      %37 = sbr.rel (0) target = $region13
    $region12: #{tpu_custom_call.1} parent=1 // pred_region
      _
    $region13: #{tpu_custom_call.1} parent=1 // pred_fallthru
      _
    // Predicated region
    $region14: #{tpu_custom_call.1} parent=1 // pred_check
      _
    $region15: #{tpu_custom_call.1} parent=1 // pred_check_branch
      %39 = sbr.rel (0) target = $region17
    $region16: #{tpu_custom_call.1} parent=1 // pred_region
      %40 = dma.done [#allocation3], 1024
    $region17: #{tpu_custom_call.1} parent=1 // pred_fallthru
      _
    // Predicated region
    $region18: #{tpu_custom_call.1} parent=1 // pred_check
      _
    $region19: #{tpu_custom_call.1} parent=1 // pred_check_branch
      %42 = sbr.rel (0) target = $region21
    $region20: #{tpu_custom_call.1} parent=1 // pred_region
      %43 = dma.done [#allocation6], 128
    $region21: #{tpu_custom_call.1} parent=1 // pred_fallthru
      _
    %v45 = vld [vmem:[#allocation5] sm:$0xff]
    %v46 = vand.u32 %v45, 65535
    %v47 = vshra.s32 %v45, 16
    %v48 = vcvt.s32.f32 %v46
    %v49 = vcvt.s32.f32 %v47
    %50 = vmax.xlane.f32.xlu0 %v49
    %v51 = vpop.xlane.xlu0 %50
    %vm52 = vcmp.eq.f32.partialorder %v49, %v51
    %v53 = vsel %vm52, %v48, -inf
    %54 = vmax.xlane.f32.xlu0 %v53
    %v55 = vpop.xlane.xlu0 %54
    %v56 = vcvt.f32.s32 %v55
    %v57 = vcvt.f32.s32 %v51
    %v58 = vshll.u32 %v57, 16
    %v59 = vadd.s32 %v58, %v56
    %vm60 = vcmp.eq.s32.totalorder %v45, %v59
    %vm61 = vcmp.gt.s32.totalorder %v45, 2402684213
    %vm62 = vmand %vm60, %vm61
    %v63 = vsel %vm62, 1.0, 0.0
    %v64 = vsel %vm60, 2147483648, %v45
    %v65 = vand.u32 %v64, 65535
    %v66 = vshra.s32 %v64, 16
    %v67 = vcvt.s32.f32 %v65
    %v68 = vcvt.s32.f32 %v66
    %69 = vmax.xlane.f32.xlu0 %v68
    %v70 = vpop.xlane.xlu0 %69
    %vm71 = vcmp.eq.f32.partialorder %v68, %v70
    %v72 = vsel %vm71, %v67, -inf
    %73 = vmax.xlane.f32.xlu0 %v72
    %v74 = vpop.xlane.xlu0 %73
    %v75 = vcvt.f32.s32 %v74
    %v76 = vcvt.f32.s32 %v70
    %v77 = vshll.u32 %v76, 16
    %v78 = vadd.s32 %v77, %v75
    %vm79 = vcmp.eq.s32.totalorder %v64, %v78
    %vm80 = vcmp.gt.s32.totalorder %v64, 2402684213
    %vm81 = vmand %vm79, %vm80
    %v82 = vsel %vm81, 1.0, %v63
    %v83 = vsel %vm79, 2147483648, %v64
    %v84 = vand.u32 %v83, 65535
    %v85 = vshra.s32 %v83, 16
    %v86 = vcvt.s32.f32 %v84
    %v87 = vcvt.s32.f32 %v85
    %88 = vmax.xlane.f32.xlu0 %v87
    %v89 = vpop.xlane.xlu0 %88
    %vm90 = vcmp.eq.f32.partialorder %v87, %v89
    %v91 = vsel %vm90, %v86, -inf
    %92 = vmax.xlane.f32.xlu0 %v91
    %v93 = vpop.xlane.xlu0 %92
    %v94 = vcvt.f32.s32 %v93
    %v95 = vcvt.f32.s32 %v89
    %v96 = vshll.u32 %v95, 16
    %v97 = vadd.s32 %v96, %v94
    %vm98 = vcmp.eq.s32.totalorder %v83, %v97
    %vm99 = vcmp.gt.s32.totalorder %v83, 2402684213
    %vm100 = vmand %vm98, %vm99
    %v101 = vsel %vm100, 1.0, %v82
    %v102 = vsel %vm98, 2147483648, %v83
    %v103 = vand.u32 %v102, 65535
    %v104 = vshra.s32 %v102, 16
    %v105 = vcvt.s32.f32 %v103
    %v106 = vcvt.s32.f32 %v104
    %107 = vmax.xlane.f32.xlu0 %v106
    %v108 = vpop.xlane.xlu0 %107
    %vm109 = vcmp.eq.f32.partialorder %v106, %v108
    %v110 = vsel %vm109, %v105, -inf
    %111 = vmax.xlane.f32.xlu0 %v110
    %v112 = vpop.xlane.xlu0 %111
    %v113 = vcvt.f32.s32 %v112
    %v114 = vcvt.f32.s32 %v108
    %v115 = vshll.u32 %v114, 16
    %v116 = vadd.s32 %v115, %v113
    %vm117 = vcmp.eq.s32.totalorder %v102, %v116
    %vm118 = vcmp.gt.s32.totalorder %v102, 2402684213
    %vm119 = vmand %vm117, %vm118
    %v120 = vsel %vm119, 1.0, %v101
    %v121 = vsel %vm117, 2147483648, %v102
    %v122 = vand.u32 %v121, 65535
    %v123 = vshra.s32 %v121, 16
    %v124 = vcvt.s32.f32 %v122
    %v125 = vcvt.s32.f32 %v123
    %126 = vmax.xlane.f32.xlu0 %v125
    %v127 = vpop.xlane.xlu0 %126
    %vm128 = vcmp.eq.f32.partialorder %v125, %v127
    %v129 = vsel %vm128, %v124, -inf
    %130 = vmax.xlane.f32.xlu0 %v129
    %v131 = vpop.xlane.xlu0 %130
    %v132 = vcvt.f32.s32 %v131
    %v133 = vcvt.f32.s32 %v127
    %v134 = vshll.u32 %v133, 16
    %v135 = vadd.s32 %v134, %v132
    %vm136 = vcmp.eq.s32.totalorder %v121, %v135
    %vm137 = vcmp.gt.s32.totalorder %v121, 2402684213
    %vm138 = vmand %vm136, %vm137
    %v139 = vsel %vm138, 1.0, %v120
    %v140 = vsel %vm136, 2147483648, %v121
    %v141 = vand.u32 %v140, 65535
    %v142 = vshra.s32 %v140, 16
    %v143 = vcvt.s32.f32 %v141
    %v144 = vcvt.s32.f32 %v142
    %145 = vmax.xlane.f32.xlu0 %v144
    %v146 = vpop.xlane.xlu0 %145
    %vm147 = vcmp.eq.f32.partialorder %v144, %v146
    %v148 = vsel %vm147, %v143, -inf
    %149 = vmax.xlane.f32.xlu0 %v148
    %v150 = vpop.xlane.xlu0 %149
    %v151 = vcvt.f32.s32 %v150
    %v152 = vcvt.f32.s32 %v146
    %v153 = vshll.u32 %v152, 16
    %v154 = vadd.s32 %v153, %v151
    %vm155 = vcmp.eq.s32.totalorder %v140, %v154
    %vm156 = vcmp.gt.s32.totalorder %v140, 2402684213
    %vm157 = vmand %vm155, %vm156
    %v158 = vsel %vm157, 1.0, %v139
    %v159 = vsel %vm155, 2147483648, %v140
    %v160 = vand.u32 %v159, 65535
    %v161 = vshra.s32 %v159, 16
    %v162 = vcvt.s32.f32 %v160
    %v163 = vcvt.s32.f32 %v161
    %164 = vmax.xlane.f32.xlu0 %v163
    %v165 = vpop.xlane.xlu0 %164
    %vm166 = vcmp.eq.f32.partialorder %v163, %v165
    %v167 = vsel %vm166, %v162, -inf
    %168 = vmax.xlane.f32.xlu0 %v167
    %v169 = vpop.xlane.xlu0 %168
    %v170 = vcvt.f32.s32 %v169
    %v171 = vcvt.f32.s32 %v165
    %v172 = vshll.u32 %v171, 16
    %v173 = vadd.s32 %v172, %v170
    %vm174 = vcmp.eq.s32.totalorder %v159, %v173
    %vm175 = vcmp.gt.s32.totalorder %v159, 2402684213
    %vm176 = vmand %vm174, %vm175
    %v177 = vsel %vm176, 1.0, %v158
    %v178 = vsel %vm174, 2147483648, %v159
    %v179 = vand.u32 %v178, 65535
    %v180 = vshra.s32 %v178, 16
    %v181 = vcvt.s32.f32 %v179
    %v182 = vcvt.s32.f32 %v180
    %183 = vmax.xlane.f32.xlu0 %v182
    %v184 = vpop.xlane.xlu0 %183
    %vm185 = vcmp.eq.f32.partialorder %v182, %v184
    %v186 = vsel %vm185, %v181, -inf
    %187 = vmax.xlane.f32.xlu0 %v186
    %v188 = vpop.xlane.xlu0 %187
    %v189 = vcvt.f32.s32 %v188
    %v190 = vcvt.f32.s32 %v184
    %v191 = vshll.u32 %v190, 16
    %v192 = vadd.s32 %v191, %v189
    %vm193 = vcmp.eq.s32.totalorder %v178, %v192
    %vm194 = vcmp.gt.s32.totalorder %v178, 2402684213
    %vm195 = vmand %vm193, %vm194
    %v196 = vsel %vm195, 1.0, %v177
    %v197 = vsel %vm193, 2147483648, %v178
    %v198 = vand.u32 %v197, 65535
    %v199 = vshra.s32 %v197, 16
    %v200 = vcvt.s32.f32 %v198
    %v201 = vcvt.s32.f32 %v199
    %202 = vmax.xlane.f32.xlu0 %v201
    %v203 = vpop.xlane.xlu0 %202
    %vm204 = vcmp.eq.f32.partialorder %v201, %v203
    %v205 = vsel %vm204, %v200, -inf
    %206 = vmax.xlane.f32.xlu0 %v205
    %v207 = vpop.xlane.xlu0 %206
    %v208 = vcvt.f32.s32 %v207
    %v209 = vcvt.f32.s32 %v203
    %v210 = vshll.u32 %v209, 16
    %v211 = vadd.s32 %v210, %v208
    %vm212 = vcmp.eq.s32.totalorder %v197, %v211
    %vm213 = vcmp.gt.s32.totalorder %v197, 2402684213
    %vm214 = vmand %vm212, %vm213
    %v215 = vsel %vm214, 1.0, %v196
    %v216 = vsel %vm212, 2147483648, %v197
    %v217 = vand.u32 %v216, 65535
    %v218 = vshra.s32 %v216, 16
    %v219 = vcvt.s32.f32 %v217
    %v220 = vcvt.s32.f32 %v218
    %221 = vmax.xlane.f32.xlu0 %v220
    %v222 = vpop.xlane.xlu0 %221
    %vm223 = vcmp.eq.f32.partialorder %v220, %v222
    %v224 = vsel %vm223, %v219, -inf
    %225 = vmax.xlane.f32.xlu0 %v224
    %v226 = vpop.xlane.xlu0 %225
    %v227 = vcvt.f32.s32 %v226
    %v228 = vcvt.f32.s32 %v222
    %v229 = vshll.u32 %v228, 16
    %v230 = vadd.s32 %v229, %v227
    %vm231 = vcmp.eq.s32.totalorder %v216, %v230
    %vm232 = vcmp.gt.s32.totalorder %v216, 2402684213
    %vm233 = vmand %vm231, %vm232
    %v234 = vsel %vm233, 1.0, %v215
    %v235 = vrot.slane %v234, 4
    %v236 = vmax.f32 %v234, %v235
    %v237 = vrot.slane %v236, 2
    %v238 = vmax.f32 %v236, %v237
    %v239 = vrot.slane %v238, 1
    %v240 = vmax.f32 %v238, %v239
    %v241 = vld [vmem:[#allocation2] sm:$0xf]
    %v242 = vld [vmem:[#allocation2 + $0x4] sm:$0xf]
    %v243 = vld [vmem:[#allocation2 + $0x8] sm:$0xf]
    %v244 = vld [vmem:[#allocation2 + $0xc] sm:$0xf]
    %v245 = vld [vmem:[#allocation2 + $0x10] sm:$0xf]
    %v246 = vld [vmem:[#allocation2 + $0x14] sm:$0xf]
    %v247 = vld [vmem:[#allocation2 + $0x18] sm:$0xf]
    %v248 = vld [vmem:[#allocation2 + $0x1c] sm:$0xf]
    %v249 = vld [vmem:[#allocation2 + $0x20] sm:$0xf]
    %v250 = vld [vmem:[#allocation2 + $0x24] sm:$0xf]
    %v251 = vld [vmem:[#allocation2 + $0x28] sm:$0xf]
    %v252 = vld [vmem:[#allocation2 + $0x2c] sm:$0xf]
    %v253 = vld [vmem:[#allocation2 + $0x30] sm:$0xf]
    %v254 = vld [vmem:[#allocation2 + $0x34] sm:$0xf]
    %v255 = vld [vmem:[#allocation2 + $0x38] sm:$0xf]
    %v256 = vld [vmem:[#allocation2 + $0x3c] sm:$0xf]
    %v257 = vpack.c.bf16 %v240, %v240
    %v274 = vunpack.c.l.b16 %v241
    %v275 = vunpack.c.l.b16 %v242
    %v276 = vunpack.c.l.b16 %v243
    %v277 = vunpack.c.l.b16 %v244
    %v278 = vunpack.c.l.b16 %v245
    %v279 = vunpack.c.l.b16 %v246
    %v280 = vunpack.c.l.b16 %v247
    %v281 = vunpack.c.l.b16 %v248
    %v282 = vunpack.c.l.b16 %v249
    %v283 = vunpack.c.l.b16 %v250
    %v284 = vunpack.c.l.b16 %v251
    %v285 = vunpack.c.l.b16 %v252
    %v286 = vunpack.c.l.b16 %v253
    %v287 = vunpack.c.l.b16 %v254
    %v288 = vunpack.c.l.b16 %v255
    %v289 = vunpack.c.l.b16 %v256
    %v290 = vpack.c.b16 %v275, %v274
    %v291 = vpack.c.b16 %v277, %v276
    %v292 = vpack.c.b16 %v279, %v278
    %v293 = vpack.c.b16 %v281, %v280
    %v294 = vpack.c.b16 %v283, %v282
    %v295 = vpack.c.b16 %v285, %v284
    %v296 = vpack.c.b16 %v287, %v286
    %v297 = vpack.c.b16 %v289, %v288
    %306 = vmatprep.subr.bf16.mxu0 0
    %307 = vmatpush1.bf16.msra.mxu0 %v297
    %308 = vmatprep.subr.bf16.mxu0 0
    %309 = vmatpush1.bf16.msra.mxu0 %v296
    %310 = vmatprep.subr.bf16.mxu0 0
    %311 = vmatpush1.bf16.msra.mxu0 %v295
    %312 = vmatprep.subr.bf16.mxu0 0
    %313 = vmatpush1.bf16.msra.mxu0 %v294
    %314 = vmatprep.subr.bf16.mxu0 0
    %315 = vmatpush1.bf16.msra.mxu0 %v293
    %316 = vmatprep.subr.bf16.mxu0 0
    %317 = vmatpush1.bf16.msra.mxu0 %v292
    %318 = vmatprep.subr.bf16.mxu0 0
    %319 = vmatpush1.bf16.msra.mxu0 %v291
    %320 = vmatprep.subr.bf16.mxu0 0
    %321 = vmatpush1.bf16.msra.mxu0 %v290
    %322 = vmatprep.subr.bf16.mxu0 0
    %323 = vmatpush2.bf16.msra.mxu0 0
    %324 = vmatprep.subr.bf16.mxu0 0
    %325 = vmatpush2.bf16.msra.mxu0 0
    %326 = vmatprep.subr.bf16.mxu0 0
    %327 = vmatpush2.bf16.msra.mxu0 0
    %328 = vmatprep.subr.bf16.mxu0 0
    %329 = vmatpush2.bf16.msra.mxu0 0
    %330 = vmatprep.subr.bf16.mxu0 0
    %331 = vmatpush2.bf16.msra.mxu0 0
    %332 = vmatprep.subr.bf16.mxu0 0
    %333 = vmatpush2.bf16.msra.mxu0 0
    %334 = vmatprep.subr.bf16.mxu0 0
    %335 = vmatpush2.bf16.msra.mxu0 0
    %336 = vmatprep.subr.bf16.mxu0 0
    %337 = vmatpush2.bf16.msra.mxu0 0
    %338 = vmatprep.mubr.bf16.mxu0 0
    %339 = vmatmul.mubr.bf16.gmra.mxu0 %v257
    %v340 = vpop.f32.mrf.mxu0
    %v341 = vadd.f32 0.0, %v340
    %v342 = vpop.f32.mrf.mxu0
    %v343 = vpop.f32.mrf.mxu0
    %v344 = vpop.f32.mrf.mxu0
    %345 = vdwg.mxu0
    %vm346 = vcmp.gt.f32.partialorder %v341, 0.0
    %vm347 = vcmp.eq.f32.partialorder %v240, 0.0
    %vm348 = vmand %vm346, %vm347
    %v349 = vld [vmem:[%s2] sm:$0x1]
    %v350 = vsel %vm348, %v349, 2147483648
    %vm351 = vcmask 1040384
    %v352 = vsel %vm351, %v350, 2147483648
    %v353 = vand.u32 %v352, 65535
    %v354 = vshra.s32 %v352, 16
    %v355 = vcvt.s32.f32 %v353
    %v356 = vcvt.s32.f32 %v354
    %357 = vmax.xlane.f32.xlu0 %v356
    %v358 = vpop.xlane.xlu0 %357
    %vm359 = vcmp.eq.f32.partialorder %v356, %v358
    %v360 = vsel %vm359, %v355, -inf
    %361 = vmax.xlane.f32.xlu0 %v360
    %v362 = vpop.xlane.xlu0 %361
    %v363 = vcvt.f32.s32 %v362
    %v364 = vcvt.f32.s32 %v358
    %v365 = vshll.u32 %v364, 16
    %v366 = vadd.s32 %v365, %v363
    %vm367 = vcmp.eq.s32.totalorder %v350, %v366
    %vm368 = vcmp.gt.s32.totalorder %v350, 2402684213
    %vm369 = vmand %vm367, %vm368
    %v370 = vsel %vm369, 1.0, %v240
    %v371 = vsel %vm367, 2147483648, %v350
    %v372 = vsel %vm351, %v371, 2147483648
    %v373 = vand.u32 %v372, 65535
    %v374 = vshra.s32 %v372, 16
    %v375 = vcvt.s32.f32 %v373
    %v376 = vcvt.s32.f32 %v374
    %377 = vmax.xlane.f32.xlu0 %v376
    %v378 = vpop.xlane.xlu0 %377
    %vm379 = vcmp.eq.f32.partialorder %v376, %v378
    %v380 = vsel %vm379, %v375, -inf
    %381 = vmax.xlane.f32.xlu0 %v380
    %v382 = vpop.xlane.xlu0 %381
    %v383 = vcvt.f32.s32 %v382
    %v384 = vcvt.f32.s32 %v378
    %v385 = vshll.u32 %v384, 16
    %v386 = vadd.s32 %v385, %v383
    %vm387 = vcmp.eq.s32.totalorder %v371, %v386
    %vm388 = vcmp.gt.s32.totalorder %v371, 2402684213
    %vm389 = vmand %vm387, %vm388
    %v390 = vsel %vm389, 1.0, %v370
    %v391 = vsel %vm387, 2147483648, %v371
    %v392 = vsel %vm351, %v391, 2147483648
    %v393 = vand.u32 %v392, 65535
    %v394 = vshra.s32 %v392, 16
    %v395 = vcvt.s32.f32 %v393
    %v396 = vcvt.s32.f32 %v394
    %397 = vmax.xlane.f32.xlu0 %v396
    %v398 = vpop.xlane.xlu0 %397
    %vm399 = vcmp.eq.f32.partialorder %v396, %v398
    %v400 = vsel %vm399, %v395, -inf
    %401 = vmax.xlane.f32.xlu0 %v400
    %v402 = vpop.xlane.xlu0 %401
    %v403 = vcvt.f32.s32 %v402
    %v404 = vcvt.f32.s32 %v398
    %v405 = vshll.u32 %v404, 16
    %v406 = vadd.s32 %v405, %v403
    %vm407 = vcmp.eq.s32.totalorder %v391, %v406
    %vm408 = vcmp.gt.s32.totalorder %v391, 2402684213
    %vm409 = vmand %vm407, %vm408
    %v410 = vsel %vm409, 1.0, %v390
    %v411 = vsel %vm407, 2147483648, %v391
    %v412 = vsel %vm351, %v411, 2147483648
    %v413 = vand.u32 %v412, 65535
    %v414 = vshra.s32 %v412, 16
    %v415 = vcvt.s32.f32 %v413
    %v416 = vcvt.s32.f32 %v414
    %417 = vmax.xlane.f32.xlu0 %v416
    %v418 = vpop.xlane.xlu0 %417
    %vm419 = vcmp.eq.f32.partialorder %v416, %v418
    %v420 = vsel %vm419, %v415, -inf
    %421 = vmax.xlane.f32.xlu0 %v420
    %v422 = vpop.xlane.xlu0 %421
    %v423 = vcvt.f32.s32 %v422
    %v424 = vcvt.f32.s32 %v418
    %v425 = vshll.u32 %v424, 16
    %v426 = vadd.s32 %v425, %v423
    %vm427 = vcmp.eq.s32.totalorder %v411, %v426
    %vm428 = vcmp.gt.s32.totalorder %v411, 2402684213
    %vm429 = vmand %vm427, %vm428
    %v430 = vsel %vm429, 1.0, %v410
    %v431 = vsel %vm427, 2147483648, %v411
    %v432 = vsel %vm351, %v431, 2147483648
    %v433 = vand.u32 %v432, 65535
    %v434 = vshra.s32 %v432, 16
    %v435 = vcvt.s32.f32 %v433
    %v436 = vcvt.s32.f32 %v434
    %437 = vmax.xlane.f32.xlu0 %v436
    %v438 = vpop.xlane.xlu0 %437
    %vm439 = vcmp.eq.f32.partialorder %v436, %v438
    %v440 = vsel %vm439, %v435, -inf
    %441 = vmax.xlane.f32.xlu0 %v440
    %v442 = vpop.xlane.xlu0 %441
    %v443 = vcvt.f32.s32 %v442
    %v444 = vcvt.f32.s32 %v438
    %v445 = vshll.u32 %v444, 16
    %v446 = vadd.s32 %v445, %v443
    %vm447 = vcmp.eq.s32.totalorder %v431, %v446
    %vm448 = vcmp.gt.s32.totalorder %v431, 2402684213
    %vm449 = vmand %vm447, %vm448
    %v450 = vsel %vm449, 1.0, %v430
    %v451 = vsel %vm447, 2147483648, %v431
    %v452 = vsel %vm351, %v451, 2147483648
    %v453 = vand.u32 %v452, 65535
    %v454 = vshra.s32 %v452, 16
    %v455 = vcvt.s32.f32 %v453
    %v456 = vcvt.s32.f32 %v454
    %457 = vmax.xlane.f32.xlu0 %v456
    %v458 = vpop.xlane.xlu0 %457
    %vm459 = vcmp.eq.f32.partialorder %v456, %v458
    %v460 = vsel %vm459, %v455, -inf
    %461 = vmax.xlane.f32.xlu0 %v460
    %v462 = vpop.xlane.xlu0 %461
    %v463 = vcvt.f32.s32 %v462
    %v464 = vcvt.f32.s32 %v458
    %v465 = vshll.u32 %v464, 16
    %v466 = vadd.s32 %v465, %v463
    %vm467 = vcmp.eq.s32.totalorder %v451, %v466
    %vm468 = vcmp.gt.s32.totalorder %v451, 2402684213
    %vm469 = vmand %vm467, %vm468
    %v470 = vsel %vm469, 1.0, %v450
    %v471 = vsel %vm467, 2147483648, %v451
    %v472 = vsel %vm351, %v471, 2147483648
    %v473 = vand.u32 %v472, 65535
    %v474 = vshra.s32 %v472, 16
    %v475 = vcvt.s32.f32 %v473
    %v476 = vcvt.s32.f32 %v474
    %477 = vmax.xlane.f32.xlu0 %v476
    %v478 = vpop.xlane.xlu0 %477
    %vm479 = vcmp.eq.f32.partialorder %v476, %v478
    %v480 = vsel %vm479, %v475, -inf
    %481 = vmax.xlane.f32.xlu0 %v480
    %v482 = vpop.xlane.xlu0 %481
    %v483 = vcvt.f32.s32 %v482
    %v484 = vcvt.f32.s32 %v478
    %v485 = vshll.u32 %v484, 16
    %v486 = vadd.s32 %v485, %v483
    %vm487 = vcmp.eq.s32.totalorder %v471, %v486
    %vm488 = vcmp.gt.s32.totalorder %v471, 2402684213
    %vm489 = vmand %vm487, %vm488
    %v490 = vsel %vm489, 1.0, %v470
    %v491 = vsel %vm487, 2147483648, %v471
    %v492 = vsel %vm351, %v491, 2147483648
    %v493 = vand.u32 %v492, 65535
    %v494 = vshra.s32 %v492, 16
    %v495 = vcvt.s32.f32 %v493
    %v496 = vcvt.s32.f32 %v494
    %497 = vmax.xlane.f32.xlu0 %v496
    %v498 = vpop.xlane.xlu0 %497
    %vm499 = vcmp.eq.f32.partialorder %v496, %v498
    %v500 = vsel %vm499, %v495, -inf
    %501 = vmax.xlane.f32.xlu0 %v500
    %v502 = vpop.xlane.xlu0 %501
    %v503 = vcvt.f32.s32 %v502
    %v504 = vcvt.f32.s32 %v498
    %v505 = vshll.u32 %v504, 16
    %v506 = vadd.s32 %v505, %v503
    %vm507 = vcmp.eq.s32.totalorder %v491, %v506
    %vm508 = vcmp.gt.s32.totalorder %v491, 2402684213
    %vm509 = vmand %vm507, %vm508
    %v510 = vsel %vm509, 1.0, %v490
    %vm511 = vcmp.eq.f32.partialorder %v510, 0.0
    %vm512 = vmand %vm346, %vm511
    %v513 = vld [vmem:[%s2 + $0x1] sm:$0x1]
    %v514 = vsel %vm512, %v513, 2147483648
    %v515 = vsel %vm351, %v514, 2147483648
    %v516 = vand.u32 %v515, 65535
    %v517 = vshra.s32 %v515, 16
    %v518 = vcvt.s32.f32 %v516
    %v519 = vcvt.s32.f32 %v517
    %520 = vmax.xlane.f32.xlu0 %v519
    %v521 = vpop.xlane.xlu0 %520
    %vm522 = vcmp.eq.f32.partialorder %v519, %v521
    %v523 = vsel %vm522, %v518, -inf
    %524 = vmax.xlane.f32.xlu0 %v523
    %v525 = vpop.xlane.xlu0 %524
    %v526 = vcvt.f32.s32 %v525
    %v527 = vcvt.f32.s32 %v521
    %v528 = vshll.u32 %v527, 16
    %v529 = vadd.s32 %v528, %v526
    %vm530 = vcmp.eq.s32.totalorder %v514, %v529
    %vm531 = vcmp.gt.s32.totalorder %v514, 2402684213
    %vm532 = vmand %vm530, %vm531
    %v533 = vsel %vm532, 1.0, %v510
    %v534 = vsel %vm530, 2147483648, %v514
    %v535 = vsel %vm351, %v534, 2147483648
    %v536 = vand.u32 %v535, 65535
    %v537 = vshra.s32 %v535, 16
    %v538 = vcvt.s32.f32 %v536
    %v539 = vcvt.s32.f32 %v537
    %540 = vmax.xlane.f32.xlu0 %v539
    %v541 = vpop.xlane.xlu0 %540
    %vm542 = vcmp.eq.f32.partialorder %v539, %v541
    %v543 = vsel %vm542, %v538, -inf
    %544 = vmax.xlane.f32.xlu0 %v543
    %v545 = vpop.xlane.xlu0 %544
    %v546 = vcvt.f32.s32 %v545
    %v547 = vcvt.f32.s32 %v541
    %v548 = vshll.u32 %v547, 16
    %v549 = vadd.s32 %v548, %v546
    %vm550 = vcmp.eq.s32.totalorder %v534, %v549
    %vm551 = vcmp.gt.s32.totalorder %v534, 2402684213
    %vm552 = vmand %vm550, %vm551
    %v553 = vsel %vm552, 1.0, %v533
    %v554 = vsel %vm550, 2147483648, %v534
    %v555 = vsel %vm351, %v554, 2147483648
    %v556 = vand.u32 %v555, 65535
    %v557 = vshra.s32 %v555, 16
    %v558 = vcvt.s32.f32 %v556
    %v559 = vcvt.s32.f32 %v557
    %560 = vmax.xlane.f32.xlu0 %v559
    %v561 = vpop.xlane.xlu0 %560
    %vm562 = vcmp.eq.f32.partialorder %v559, %v561
    %v563 = vsel %vm562, %v558, -inf
    %564 = vmax.xlane.f32.xlu0 %v563
    %v565 = vpop.xlane.xlu0 %564
    %v566 = vcvt.f32.s32 %v565
    %v567 = vcvt.f32.s32 %v561
    %v568 = vshll.u32 %v567, 16
    %v569 = vadd.s32 %v568, %v566
    %vm570 = vcmp.eq.s32.totalorder %v554, %v569
    %vm571 = vcmp.gt.s32.totalorder %v554, 2402684213
    %vm572 = vmand %vm570, %vm571
    %v573 = vsel %vm572, 1.0, %v553
    %v574 = vsel %vm570, 2147483648, %v554
    %v575 = vsel %vm351, %v574, 2147483648
    %v576 = vand.u32 %v575, 65535
    %v577 = vshra.s32 %v575, 16
    %v578 = vcvt.s32.f32 %v576
    %v579 = vcvt.s32.f32 %v577
    %580 = vmax.xlane.f32.xlu0 %v579
    %v581 = vpop.xlane.xlu0 %580
    %vm582 = vcmp.eq.f32.partialorder %v579, %v581
    %v583 = vsel %vm582, %v578, -inf
    %584 = vmax.xlane.f32.xlu0 %v583
    %v585 = vpop.xlane.xlu0 %584
    %v586 = vcvt.f32.s32 %v585
    %v587 = vcvt.f32.s32 %v581
    %v588 = vshll.u32 %v587, 16
    %v589 = vadd.s32 %v588, %v586
    %vm590 = vcmp.eq.s32.totalorder %v574, %v589
    %vm591 = vcmp.gt.s32.totalorder %v574, 2402684213
    %vm592 = vmand %vm590, %vm591
    %v593 = vsel %vm592, 1.0, %v573
    %594 = vst [vmem:[#allocation7] sm:$0x1] %v240
    %595 = vst [vmem:[#allocation8] sm:$0x1] %v593
    // Predicated region
    $region22: #{tpu_custom_call.1} parent=1 // pred_check
      _
    $region23: #{tpu_custom_call.1} parent=1 // pred_check_branch
      %597 = sbr.rel (0) target = $region25
    $region24: #{tpu_custom_call.1} parent=1 // pred_region
      %s599 = ssub.s32 16, 16
      %600 = vsyncadd [#allocation4], %s599
      %s602 = sshll.u32 [#allocation7], 4
      %s603 = int_to_ptr.vmem [resolvable:$true] %s602
      %605 = dma.vmem_to_hbm [thread:$0]  %s603, 16, %s3, [#allocation4]
    $region25: #{tpu_custom_call.1} parent=1 // pred_fallthru
      _
    // Predicated region
    $region26: #{tpu_custom_call.1} parent=1 // pred_check
      _
    $region27: #{tpu_custom_call.1} parent=1 // pred_check_branch
      %607 = sbr.rel (0) target = $region29
    $region28: #{tpu_custom_call.1} parent=1 // pred_region
      %s609 = ssub.s32 16, 16
      %610 = vsyncadd [#allocation9], %s609
      %s612 = sshll.u32 [#allocation8], 4
      %s613 = int_to_ptr.vmem [resolvable:$true] %s612
      %615 = dma.vmem_to_hbm [thread:$0]  %s613, 16, %s4, [#allocation9]
    $region29: #{tpu_custom_call.1} parent=1 // pred_fallthru
      _
    // Predicated region
    $region30: #{tpu_custom_call.1} parent=1 // pred_check
      _
    $region31: #{tpu_custom_call.1} parent=1 // pred_check_branch
      %617 = sbr.rel (0) target = $region33
    $region32: #{tpu_custom_call.1} parent=1 // pred_region
      %618 = dma.done [#allocation4], 16
    $region33: #{tpu_custom_call.1} parent=1 // pred_fallthru
      _
    // Predicated region
    $region34: #{tpu_custom_call.1} parent=1 // pred_check
      _
    $region35: #{tpu_custom_call.1} parent=1 // pred_check_branch
      %620 = sbr.rel (0) target = $region37
    $region36: #{tpu_custom_call.1} parent=1 // pred_region
      %621 = dma.done [#allocation9], 16
    $region37: #{tpu_custom_call.1} parent=1 // pred_fallthru
      _
    %622 = vsyncpa [#allocation3], 1
    %623 = vsyncpa [#allocation6], 1
    %624 = vsyncpa [#allocation4], 1
    %625 = vsyncpa [#allocation9], 1

</llo_original>
